<compile_context>
chip_gen: v7x
topology: tpu7x:2x2x1
jax: 0.10.0
libtpu: 0.0.40
codegen_flags: <defaults>
</compile_context>

<pallas_src>
import functools

import jax
import jax.numpy as jnp
from jax.experimental import pallas as pl
from jax.experimental.pallas import tpu as pltpu


def mlp_kernel(x_ref,
               w1_ref, b1_ref,
               w2_ref, b2_ref,
               w3_ref, b3_ref,
               w4_ref, b4_ref,
               o_ref):
    """Feature-major fused MLP: o = W4 @ tanh(W3 @ tanh(W2 @ tanh(W1 @ x + b1) + b2) + b3) + b4."""
    x = x_ref[...]                                             # (5, TILE_B) bf16
    h1 = jnp.tanh(jnp.dot(w1_ref[...], x,
                          preferred_element_type=jnp.float32) + b1_ref[...])
    h2 = jnp.tanh(jnp.dot(w2_ref[...], h1.astype(w2_ref.dtype),
                          preferred_element_type=jnp.float32) + b2_ref[...])
    h3 = jnp.tanh(jnp.dot(w3_ref[...], h2.astype(w3_ref.dtype),
                          preferred_element_type=jnp.float32) + b3_ref[...])
    out = jnp.dot(w4_ref[...], h3.astype(w4_ref.dtype),
                  preferred_element_type=jnp.float32) + b4_ref[...]
    o_ref[...] = out.astype(o_ref.dtype)                       # (4, TILE_B) lane-dense


def mlp_forward(x, params, *, tile_b=512, compute_dtype=jnp.bfloat16):
    """x: (B, 5) activations; params = (w1,b1,...,w4,b4), wK is [out,in], bK is [out,1]."""
    w1, b1, w2, b2, w3, b3, w4, b4 = params
    B, in_dim = x.shape
    out_dim = w4.shape[0]
    out_dtype = x.dtype

    # Lane-aligned batch tile (multiple of 128), capped so tiny batches use one tile.
    tile_b = max(128, min(int(tile_b), pl.cdiv(B, 128) * 128))
    b_pad = pl.cdiv(B, tile_b) * tile_b
    grid = (b_pad // tile_b,)

    # Feature-major bf16 input (pad batch to the tile); weights bf16, biases stay f32.
    x_t = jnp.zeros((in_dim, b_pad), compute_dtype).at[:, :B].set(
        x.T.astype(compute_dtype))
    ws = tuple(w.astype(compute_dtype) for w in (w1, w2, w3, w4))
    bs = (b1, b2, b3, b4)

    x_spec = pl.BlockSpec((in_dim, tile_b), lambda i: (0, i))
    out_spec = pl.BlockSpec((out_dim, tile_b), lambda i: (0, i))
    const = lambda i: (0, 0)   # weights / biases: same block every step -> VMEM-resident
    w_specs = [pl.BlockSpec(w.shape, const) for w in ws]
    b_specs = [pl.BlockSpec(b.shape, const) for b in bs]

    flops = 2 * b_pad * (5 * 32 + 32 * 16 + 16 * 8 + 8 * 4)
    transcendentals = b_pad * (32 + 16 + 8)
    bytes_accessed = (x_t.size * x_t.dtype.itemsize
                      + sum(w.size * w.dtype.itemsize for w in ws)
                      + sum(b.size * b.dtype.itemsize for b in bs)
                      + b_pad * out_dim * jnp.dtype(out_dtype).itemsize)

    in_specs = [x_spec]
    for ws_, bs_ in zip(w_specs, b_specs):
        in_specs += [ws_, bs_]

    out_t = pl.pallas_call(
        mlp_kernel,
        out_shape=jax.ShapeDtypeStruct((out_dim, b_pad), out_dtype),
        grid_spec=pltpu.PrefetchScalarGridSpec(
            num_scalar_prefetch=0,
            grid=grid,
            in_specs=in_specs,
            out_specs=out_spec,
        ),
        compiler_params=pltpu.CompilerParams(
            dimension_semantics=("parallel",),       # v7x: shard batch over 2 TCs
            vmem_limit_bytes=32 * 1024 * 1024,       # fits v7x's 64 MiB physical VMEM
        ),
        cost_estimate=pl.CostEstimate(
            flops=flops,
            transcendentals=transcendentals,
            bytes_accessed=bytes_accessed,
        ),
    )(x_t, ws[0], bs[0], ws[1], bs[1], ws[2], bs[2], ws[3], bs[3])

    return out_t[:, :B].T                             # back to (B, 4)


def init_params(key):
    """Matches the PyTorch module: xavier_uniform_ weights, zero biases."""
    dims = [(5, 32), (32, 16), (16, 8), (8, 4)]
    keys = jax.random.split(key, len(dims))
    params = []
    for k, (fi, fo) in zip(keys, dims):
        a = (6.0 / (fi + fo)) ** 0.5                  # xavier_uniform_, gain=1
        w = jax.random.uniform(k, (fo, fi), jnp.float32, minval=-a, maxval=a)
        params.append(w)                              # torch-native [out, in]
        params.append(jnp.zeros((fo, 1), jnp.float32))
    return tuple(params)


def mlp_reference(x, params, compute_dtype=jnp.bfloat16):
    """Pure-JAX reference mirroring the kernel's dtype handling exactly."""
    w1, b1, w2, b2, w3, b3, w4, b4 = params
    h = x.T.astype(compute_dtype)
    for w, b in ((w1, b1), (w2, b2), (w3, b3)):
        h = jnp.tanh(jnp.dot(w.astype(compute_dtype), h,
                             preferred_element_type=jnp.float32) + b)
        h = h.astype(compute_dtype)
    out = jnp.dot(w4.astype(compute_dtype), h,
                  preferred_element_type=jnp.float32) + b4
    return out.T.astype(x.dtype)


if __name__ == "__main__":
    key = jax.random.PRNGKey(0)
    k_param, k_x = jax.random.split(key)
    params = init_params(k_param)

    B = 8
    x = jax.random.normal(k_x, (B, 5), jnp.float32)

    out = mlp_forward(x, params)
    out = jax.block_until_ready(out)

    ref = mlp_reference(x, params)
    assert out.shape == (B, 4), out.shape
    assert jnp.allclose(out, ref, atol=1e-3, rtol=1e-3), "mismatch vs reference"

    print("KERNEL_OK")
</pallas_src>

<mosaic_0001>
module attributes {stable_mosaic.version = 11 : i64} {
  func.func @mlp_kernel(%arg0: i32, %arg1: memref<5x128xbf16, #tpu.memory_space<vmem>>, %arg2: memref<32x5xbf16, #tpu.memory_space<vmem>>, %arg3: memref<32x1xf32, #tpu.memory_space<vmem>>, %arg4: memref<16x32xbf16, #tpu.memory_space<vmem>>, %arg5: memref<16x1xf32, #tpu.memory_space<vmem>>, %arg6: memref<8x16xbf16, #tpu.memory_space<vmem>>, %arg7: memref<8x1xf32, #tpu.memory_space<vmem>>, %arg8: memref<4x8xbf16, #tpu.memory_space<vmem>>, %arg9: memref<4x1xf32, #tpu.memory_space<vmem>>, %arg10: memref<4x128xf32, #tpu.memory_space<vmem>>) attributes {dimension_semantics = [#tpu.dimension_semantics<parallel>], iteration_bounds = array<i64: 1>, scalar_prefetch = 0 : i64, scratch_operands = 0 : i64, tpu.core_type = #tpu.core_type<tc>, window_params = [{transform_indices = @transform_0, window_bounds = array<i64: 5, 128>}, {pipeline_mode = #tpu.pipeline_mode<synchronous>, transform_indices = @transform_1, window_bounds = array<i64: 32, 5>}, {pipeline_mode = #tpu.pipeline_mode<synchronous>, transform_indices = @transform_2, window_bounds = array<i64: 32, 1>}, {pipeline_mode = #tpu.pipeline_mode<synchronous>, transform_indices = @transform_3, window_bounds = array<i64: 16, 32>}, {pipeline_mode = #tpu.pipeline_mode<synchronous>, transform_indices = @transform_4, window_bounds = array<i64: 16, 1>}, {pipeline_mode = #tpu.pipeline_mode<synchronous>, transform_indices = @transform_5, window_bounds = array<i64: 8, 16>}, {pipeline_mode = #tpu.pipeline_mode<synchronous>, transform_indices = @transform_6, window_bounds = array<i64: 8, 1>}, {pipeline_mode = #tpu.pipeline_mode<synchronous>, transform_indices = @transform_7, window_bounds = array<i64: 4, 8>}, {pipeline_mode = #tpu.pipeline_mode<synchronous>, transform_indices = @transform_8, window_bounds = array<i64: 4, 1>}, {transform_indices = @transform_9, window_bounds = array<i64: 4, 128>}]} {
    %c0 = arith.constant 0 : index
    %c0_0 = arith.constant 0 : index
    %0 = vector.load %arg1[%c0, %c0_0] : memref<5x128xbf16, #tpu.memory_space<vmem>>, vector<5x128xbf16>
    %c0_1 = arith.constant 0 : index
    %c0_2 = arith.constant 0 : index
    %1 = vector.load %arg2[%c0_1, %c0_2] : memref<32x5xbf16, #tpu.memory_space<vmem>>, vector<32x5xbf16>
    %cst = arith.constant dense<0.000000e+00> : vector<32x128xf32>
    %2 = tpu.matmul %1, %0, %cst {dimension_numbers = #tpu.dot_dimension_numbers<[1], [0], [0], [1], [0, 0, 1, 1], [], []>} : vector<32x5xbf16>, vector<5x128xbf16>, vector<32x128xf32> -> vector<32x128xf32>
    %c0_3 = arith.constant 0 : index
    %c0_4 = arith.constant 0 : index
    %3 = vector.load %arg3[%c0_3, %c0_4] : memref<32x1xf32, #tpu.memory_space<vmem>>, vector<32x1xf32>
    %4 = vector.broadcast %3 : vector<32x1xf32> to vector<32x128xf32>
    %5 = arith.addf %2, %4 : vector<32x128xf32>
    %6 = math.tanh %5 : vector<32x128xf32>
    %c0_5 = arith.constant 0 : index
    %c0_6 = arith.constant 0 : index
    %7 = vector.load %arg4[%c0_5, %c0_6] : memref<16x32xbf16, #tpu.memory_space<vmem>>, vector<16x32xbf16>
    %8 = arith.truncf %6 : vector<32x128xf32> to vector<32x128xbf16>
    %cst_7 = arith.constant dense<0.000000e+00> : vector<16x128xf32>
    %9 = tpu.matmul %7, %8, %cst_7 {dimension_numbers = #tpu.dot_dimension_numbers<[1], [0], [0], [1], [0, 0, 1, 1], [], []>} : vector<16x32xbf16>, vector<32x128xbf16>, vector<16x128xf32> -> vector<16x128xf32>
    %c0_8 = arith.constant 0 : index
    %c0_9 = arith.constant 0 : index
    %10 = vector.load %arg5[%c0_8, %c0_9] : memref<16x1xf32, #tpu.memory_space<vmem>>, vector<16x1xf32>
    %11 = vector.broadcast %10 : vector<16x1xf32> to vector<16x128xf32>
    %12 = arith.addf %9, %11 : vector<16x128xf32>
    %13 = math.tanh %12 : vector<16x128xf32>
    %c0_10 = arith.constant 0 : index
    %c0_11 = arith.constant 0 : index
    %14 = vector.load %arg6[%c0_10, %c0_11] : memref<8x16xbf16, #tpu.memory_space<vmem>>, vector<8x16xbf16>
    %15 = arith.truncf %13 : vector<16x128xf32> to vector<16x128xbf16>
    %cst_12 = arith.constant dense<0.000000e+00> : vector<8x128xf32>
    %16 = tpu.matmul %14, %15, %cst_12 {dimension_numbers = #tpu.dot_dimension_numbers<[1], [0], [0], [1], [0, 0, 1, 1], [], []>} : vector<8x16xbf16>, vector<16x128xbf16>, vector<8x128xf32> -> vector<8x128xf32>
    %c0_13 = arith.constant 0 : index
    %c0_14 = arith.constant 0 : index
    %17 = vector.load %arg7[%c0_13, %c0_14] : memref<8x1xf32, #tpu.memory_space<vmem>>, vector<8x1xf32>
    %18 = vector.broadcast %17 : vector<8x1xf32> to vector<8x128xf32>
    %19 = arith.addf %16, %18 : vector<8x128xf32>
    %20 = math.tanh %19 : vector<8x128xf32>
    %c0_15 = arith.constant 0 : index
    %c0_16 = arith.constant 0 : index
    %21 = vector.load %arg8[%c0_15, %c0_16] : memref<4x8xbf16, #tpu.memory_space<vmem>>, vector<4x8xbf16>
    %22 = arith.truncf %20 : vector<8x128xf32> to vector<8x128xbf16>
    %cst_17 = arith.constant dense<0.000000e+00> : vector<4x128xf32>
    %23 = tpu.matmul %21, %22, %cst_17 {dimension_numbers = #tpu.dot_dimension_numbers<[1], [0], [0], [1], [0, 0, 1, 1], [], []>} : vector<4x8xbf16>, vector<8x128xbf16>, vector<4x128xf32> -> vector<4x128xf32>
    %c0_18 = arith.constant 0 : index
    %c0_19 = arith.constant 0 : index
    %24 = vector.load %arg9[%c0_18, %c0_19] : memref<4x1xf32, #tpu.memory_space<vmem>>, vector<4x1xf32>
    %25 = vector.broadcast %24 : vector<4x1xf32> to vector<4x128xf32>
    %26 = arith.addf %23, %25 : vector<4x128xf32>
    %c0_20 = arith.constant 0 : index
    %c0_21 = arith.constant 0 : index
    %27 = vector.load %arg10[%c0_20, %c0_21] : memref<4x128xf32, #tpu.memory_space<vmem>>, vector<4x128xf32>
    tpu.vector_store %arg10[%c0_20, %c0_21], %26 {strides = array<i32>} : memref<4x128xf32, #tpu.memory_space<vmem>>, vector<4x128xf32>,
    return
  }
  func.func @transform_0(%arg0: i32) -> (i32, i32) {
    %c0_i32 = arith.constant 0 : i32
    %c0_i32_0 = arith.constant 0 : i32
    return %c0_i32, %arg0 : i32, i32
  }
  func.func @transform_1(%arg0: i32) -> (i32, i32) {
    %c0_i32 = arith.constant 0 : i32
    %c0_i32_0 = arith.constant 0 : i32
    %c0_i32_1 = arith.constant 0 : i32
    return %c0_i32, %c0_i32_0 : i32, i32
  }
  func.func @transform_2(%arg0: i32) -> (i32, i32) {
    %c0_i32 = arith.constant 0 : i32
    %c0_i32_0 = arith.constant 0 : i32
    %c0_i32_1 = arith.constant 0 : i32
    return %c0_i32, %c0_i32_0 : i32, i32
  }
  func.func @transform_3(%arg0: i32) -> (i32, i32) {
    %c0_i32 = arith.constant 0 : i32
    %c0_i32_0 = arith.constant 0 : i32
    %c0_i32_1 = arith.constant 0 : i32
    return %c0_i32, %c0_i32_0 : i32, i32
  }
  func.func @transform_4(%arg0: i32) -> (i32, i32) {
    %c0_i32 = arith.constant 0 : i32
    %c0_i32_0 = arith.constant 0 : i32
    %c0_i32_1 = arith.constant 0 : i32
    return %c0_i32, %c0_i32_0 : i32, i32
  }
  func.func @transform_5(%arg0: i32) -> (i32, i32) {
    %c0_i32 = arith.constant 0 : i32
    %c0_i32_0 = arith.constant 0 : i32
    %c0_i32_1 = arith.constant 0 : i32
    return %c0_i32, %c0_i32_0 : i32, i32
  }
  func.func @transform_6(%arg0: i32) -> (i32, i32) {
    %c0_i32 = arith.constant 0 : i32
    %c0_i32_0 = arith.constant 0 : i32
    %c0_i32_1 = arith.constant 0 : i32
    return %c0_i32, %c0_i32_0 : i32, i32
  }
  func.func @transform_7(%arg0: i32) -> (i32, i32) {
    %c0_i32 = arith.constant 0 : i32
    %c0_i32_0 = arith.constant 0 : i32
    %c0_i32_1 = arith.constant 0 : i32
    return %c0_i32, %c0_i32_0 : i32, i32
  }
  func.func @transform_8(%arg0: i32) -> (i32, i32) {
    %c0_i32 = arith.constant 0 : i32
    %c0_i32_0 = arith.constant 0 : i32
    %c0_i32_1 = arith.constant 0 : i32
    return %c0_i32, %c0_i32_0 : i32, i32
  }
  func.func @transform_9(%arg0: i32) -> (i32, i32) {
    %c0_i32 = arith.constant 0 : i32
    %c0_i32_0 = arith.constant 0 : i32
    return %c0_i32, %arg0 : i32, i32
  }
}

</mosaic_0001>

<llo_original>
// kernel: tpu_custom_call.1
$region0: #{tpu_custom_call.1}
  #allocation0 [shape = 'u32[]', space=smem, size = 0x4, offset = 0x4, fixed_abs, tag = 'smem constant byte address 0x4 - core index']
  #allocation1 [shape = 'u32[144,128]{1,0:T(1,128)}', space=vmem, size = 0x12000, scoped, tag = 'internal scratch']
  %s0 = inlined_call_operand.vmem [shape: bf16[5,128], index: 0, kind: input, shape index: {}]
  %s1 = inlined_call_operand.vmem [shape: bf16[32,5], index: 1, kind: input, shape index: {}]
  %s2 = inlined_call_operand.vmem [shape: f32[32,1], index: 2, kind: input, shape index: {}]
  %s3 = inlined_call_operand.vmem [shape: bf16[16,32], index: 3, kind: input, shape index: {}]
  %s4 = inlined_call_operand.vmem [shape: f32[16,1], index: 4, kind: input, shape index: {}]
  %s5 = inlined_call_operand.vmem [shape: bf16[8,16], index: 5, kind: input, shape index: {}]
  %s6 = inlined_call_operand.vmem [shape: f32[8,1], index: 6, kind: input, shape index: {}]
  %s7 = inlined_call_operand.vmem [shape: bf16[4,8], index: 7, kind: input, shape index: {}]
  %s8 = inlined_call_operand.vmem [shape: f32[4,1], index: 8, kind: input, shape index: {}]
  %s9 = inlined_call_operand.hbm [shape: f32[4,128], index: 9, kind: output, shape index: {}]
  %s10 = sld [smem:[#allocation0]]
  $region46: #{tpu_custom_call.1} parent=0
    _
  %s12 = ssub.s32 1, %s10
  %s13 = scalar_select 0, %s12, %s10
  $region1: #{tpu_custom_call.1} parent=0
    #allocation2 [shape = 'u8[2048]{0}', space=vmem, size = 0x800, scoped, tag = 'output window, operand 0, single buffered']
    #allocation3 [shape = 's32[1]{0}', space=sflag, size = 0x4, scoped, tag = 'scoped memory for tpu_custom_call.1']
    %14 = vsyncpa [#allocation3], 0
    // Predicated region
    $region2: #{tpu_custom_call.1} parent=1 // pred_check
      _
    $region3: #{tpu_custom_call.1} parent=1 // pred_check_branch
      %16 = sbr.rel (0) target = $region5
    $region4: #{tpu_custom_call.1} parent=1 // pred_region
      _
    $region5: #{tpu_custom_call.1} parent=1 // pred_fallthru
      _
    // Predicated region
    $region6: #{tpu_custom_call.1} parent=1 // pred_check
      _
    $region7: #{tpu_custom_call.1} parent=1 // pred_check_branch
      %18 = sbr.rel (0) target = $region9
    $region8: #{tpu_custom_call.1} parent=1 // pred_region
      _
    $region9: #{tpu_custom_call.1} parent=1 // pred_fallthru
      _
    // Predicated region
    $region10: #{tpu_custom_call.1} parent=1 // pred_check
      _
    $region11: #{tpu_custom_call.1} parent=1 // pred_check_branch
      %20 = sbr.rel (0) target = $region13
    $region12: #{tpu_custom_call.1} parent=1 // pred_region
      _
    $region13: #{tpu_custom_call.1} parent=1 // pred_fallthru
      _
    // Predicated region
    $region14: #{tpu_custom_call.1} parent=1 // pred_check
      _
    $region15: #{tpu_custom_call.1} parent=1 // pred_check_branch
      %22 = sbr.rel (0) target = $region17
    $region16: #{tpu_custom_call.1} parent=1 // pred_region
      _
    $region17: #{tpu_custom_call.1} parent=1 // pred_fallthru
      _
    // Predicated region
    $region18: #{tpu_custom_call.1} parent=1 // pred_check
      _
    $region19: #{tpu_custom_call.1} parent=1 // pred_check_branch
      %24 = sbr.rel (0) target = $region21
    $region20: #{tpu_custom_call.1} parent=1 // pred_region
      _
    $region21: #{tpu_custom_call.1} parent=1 // pred_fallthru
      _
    // Predicated region
    $region22: #{tpu_custom_call.1} parent=1 // pred_check
      _
    $region23: #{tpu_custom_call.1} parent=1 // pred_check_branch
      %26 = sbr.rel (0) target = $region25
    $region24: #{tpu_custom_call.1} parent=1 // pred_region
      _
    $region25: #{tpu_custom_call.1} parent=1 // pred_fallthru
      _
    // Predicated region
    $region26: #{tpu_custom_call.1} parent=1 // pred_check
      _
    $region27: #{tpu_custom_call.1} parent=1 // pred_check_branch
      %28 = sbr.rel (0) target = $region29
    $region28: #{tpu_custom_call.1} parent=1 // pred_region
      _
    $region29: #{tpu_custom_call.1} parent=1 // pred_fallthru
      _
    // Predicated region
    $region30: #{tpu_custom_call.1} parent=1 // pred_check
      _
    $region31: #{tpu_custom_call.1} parent=1 // pred_check_branch
      %30 = sbr.rel (0) target = $region33
    $region32: #{tpu_custom_call.1} parent=1 // pred_region
      _
    $region33: #{tpu_custom_call.1} parent=1 // pred_fallthru
      _
    // Predicated region
    $region34: #{tpu_custom_call.1} parent=1 // pred_check
      _
    $region35: #{tpu_custom_call.1} parent=1 // pred_check_branch
      %32 = sbr.rel (0) target = $region37
    $region36: #{tpu_custom_call.1} parent=1 // pred_region
      _
    $region37: #{tpu_custom_call.1} parent=1 // pred_fallthru
      _
    %v34 = vld [vmem:[%s0] sm:$0x7]
    %v35 = vld [vmem:[%s1] sm:$0xf]
    %v36 = vld [vmem:[%s1 + $0x4] sm:$0xf]
    %v37 = vld [vmem:[%s1 + $0x8] sm:$0xf]
    %v38 = vld [vmem:[%s1 + $0xc] sm:$0xf]
    %v39 = vld [vmem:[%s2] sm:$0xff]
    %v40 = vld [vmem:[%s2 + $0x8] sm:$0xff]
    %v41 = vld [vmem:[%s2 + $0x10] sm:$0xff]
    %v42 = vld [vmem:[%s2 + $0x18] sm:$0xff]
    %44 = vset.pattern.permute.xlu0 0
    %45 = vperm.xlu0 %44, %v39
    %v46 = vpop.permute.xlu0 %45
    %49 = vset.pattern.permute.xlu0 0
    %50 = vperm.xlu0 %49, %v40
    %v51 = vpop.permute.xlu0 %50
    %54 = vset.pattern.permute.xlu0 0
    %55 = vperm.xlu0 %54, %v41
    %v56 = vpop.permute.xlu0 %55
    %59 = vset.pattern.permute.xlu0 0
    %60 = vperm.xlu0 %59, %v42
    %v61 = vpop.permute.xlu0 %60
    %v67 = vunpack.c.l.b16 %v35
    %v68 = vunpack.c.l.b16 %v36
    %v69 = vunpack.c.l.b16 %v37
    %v70 = vunpack.c.l.b16 %v38
    %v71 = vpack.c.b16 %v68, %v67
    %v72 = vpack.c.b16 %v70, %v69
    %vm73 = vcmask 39936
    %v75 = vsel %vm73, %v71, 0
    %v78 = vsel %vm73, %v72, 0
    %vm80 = vcmask 1041408
    %vm81 = vcmask 1042432
    %v82 = vsel %vm80, 4294967295, 65535
    %v83 = vsel %vm81, %v82, 0
    %v85 = vand.u32 %v34, %v83
    %87 = vmatprep.subr.bf16.mxu0 0
    %88 = vmatpush1.bf16.msra.mxu0 %v85
    %89 = vmatprep.subr.bf16.mxu0 0
    %90 = vmatpush1.bf16.msra.mxu0 0
    %91 = vmatprep.subr.bf16.mxu0 0
    %92 = vmatpush1.bf16.msra.mxu0 0
    %93 = vmatprep.subr.bf16.mxu0 0
    %94 = vmatpush1.bf16.msra.mxu0 0
    %95 = vmatprep.subr.bf16.mxu0 0
    %96 = vmatpush1.bf16.msra.mxu0 0
    %97 = vmatprep.subr.bf16.mxu0 0
    %98 = vmatpush1.bf16.msra.mxu0 0
    %99 = vmatprep.subr.bf16.mxu0 0
    %100 = vmatpush1.bf16.msra.mxu0 0
    %101 = vmatprep.subr.bf16.mxu0 0
    %102 = vmatpush1.bf16.msra.mxu0 0
    %103 = vmatprep.subr.bf16.mxu0 0
    %104 = vmatpush1.bf16.msra.mxu0 0
    %105 = vmatprep.subr.bf16.mxu0 0
    %106 = vmatpush1.bf16.msra.mxu0 0
    %107 = vmatprep.subr.bf16.mxu0 0
    %108 = vmatpush1.bf16.msra.mxu0 0
    %109 = vmatprep.subr.bf16.mxu0 0
    %110 = vmatpush1.bf16.msra.mxu0 0
    %111 = vmatprep.subr.bf16.mxu0 0
    %112 = vmatpush1.bf16.msra.mxu0 0
    %113 = vmatprep.subr.bf16.mxu0 0
    %114 = vmatpush1.bf16.msra.mxu0 0
    %115 = vmatprep.subr.bf16.mxu0 0
    %116 = vmatpush1.bf16.msra.mxu0 0
    %117 = vmatprep.subr.bf16.mxu0 0
    %118 = vmatpush1.bf16.msra.mxu0 0
    %119 = vmatprep.mubr.bf16.mxu0 0
    %120 = vmatmul.mubr.bf16.gmra.mrb[0].mxu0 %v75
    %v121 = vpop.f32.mrb[0].mxu0
    %v122 = vadd.f32 %v46, %v121
    %v123 = vpop.f32.mrb[0].mxu0
    %v124 = vpop.f32.mrb[0].mxu0
    %v125 = vadd.f32 %v51, %v124
    %v126 = vpop.f32.mrb[0].mxu0
    %127 = vmatprep.mubr.bf16.mxu0 0
    %128 = vmatmul.mubr.bf16.gmra.mrb[0].mxu0 %v78
    %v129 = vpop.f32.mrb[0].mxu0
    %v130 = vadd.f32 %v56, %v129
    %v131 = vpop.f32.mrb[0].mxu0
    %v132 = vpop.f32.mrb[0].mxu0
    %v133 = vadd.f32 %v61, %v132
    %v134 = vpop.f32.mrb[0].mxu0
    %135 = vdwg.mxu0
    %v136 = vtanh.pop %v122
    %v137 = vtanh.pop %v125
    %v138 = vtanh.pop %v130
    %v139 = vtanh.pop %v133
    %v140 = vld [vmem:[%s3] sm:$0xf]
    %v141 = vld [vmem:[%s3 + $0x4] sm:$0xf]
    %v142 = vpack.c.bf16 %v137, %v136
    %v143 = vpack.c.bf16 %v139, %v138
    %v144 = vld [vmem:[%s4] sm:$0xff]
    %v145 = vld [vmem:[%s4 + $0x8] sm:$0xff]
    %147 = vset.pattern.permute.xlu0 0
    %148 = vperm.xlu0 %147, %v144
    %v149 = vpop.permute.xlu0 %148
    %152 = vset.pattern.permute.xlu0 0
    %153 = vperm.xlu0 %152, %v145
    %v154 = vpop.permute.xlu0 %153
    %v158 = vunpack.c.l.b16 %v140
    %v159 = vunpack.c.l.b16 %v141
    %v160 = vpack.c.b16 %v159, %v158
    %vm161 = vcmask 261120
    %v163 = vsel %vm161, %v160, 0
    %165 = vmatprep.subr.bf16.mxu0 0
    %166 = vmatpush1.bf16.msra.mxu0 %v142
    %167 = vmatprep.subr.bf16.mxu0 0
    %168 = vmatpush1.bf16.msra.mxu0 %v143
    %169 = vmatprep.subr.bf16.mxu0 0
    %170 = vmatpush1.bf16.msra.mxu0 0
    %171 = vmatprep.subr.bf16.mxu0 0
    %172 = vmatpush1.bf16.msra.mxu0 0
    %173 = vmatprep.subr.bf16.mxu0 0
    %174 = vmatpush1.bf16.msra.mxu0 0
    %175 = vmatprep.subr.bf16.mxu0 0
    %176 = vmatpush1.bf16.msra.mxu0 0
    %177 = vmatprep.subr.bf16.mxu0 0
    %178 = vmatpush1.bf16.msra.mxu0 0
    %179 = vmatprep.subr.bf16.mxu0 0
    %180 = vmatpush1.bf16.msra.mxu0 0
    %181 = vmatprep.subr.bf16.mxu0 0
    %182 = vmatpush1.bf16.msra.mxu0 0
    %183 = vmatprep.subr.bf16.mxu0 0
    %184 = vmatpush1.bf16.msra.mxu0 0
    %185 = vmatprep.subr.bf16.mxu0 0
    %186 = vmatpush1.bf16.msra.mxu0 0
    %187 = vmatprep.subr.bf16.mxu0 0
    %188 = vmatpush1.bf16.msra.mxu0 0
    %189 = vmatprep.subr.bf16.mxu0 0
    %190 = vmatpush1.bf16.msra.mxu0 0
    %191 = vmatprep.subr.bf16.mxu0 0
    %192 = vmatpush1.bf16.msra.mxu0 0
    %193 = vmatprep.subr.bf16.mxu0 0
    %194 = vmatpush1.bf16.msra.mxu0 0
    %195 = vmatprep.subr.bf16.mxu0 0
    %196 = vmatpush1.bf16.msra.mxu0 0
    %197 = vmatprep.mubr.bf16.mxu0 0
    %198 = vmatmul.mubr.bf16.gmra.mrb[0].mxu0 %v163
    %v199 = vpop.f32.mrb[0].mxu0
    %v200 = vadd.f32 %v149, %v199
    %v201 = vpop.f32.mrb[0].mxu0
    %v202 = vpop.f32.mrb[0].mxu0
    %v203 = vadd.f32 %v154, %v202
    %v204 = vpop.f32.mrb[0].mxu0
    %205 = vdwg.mxu0
    %v206 = vtanh.pop %v200
    %v207 = vtanh.pop %v203
    %v208 = vld [vmem:[%s5] sm:$0xf]
    %v209 = vpack.c.bf16 %v207, %v206
    %v210 = vld [vmem:[%s6] sm:$0xff]
    %212 = vset.pattern.permute.xlu0 0
    %213 = vperm.xlu0 %212, %v210
    %v214 = vpop.permute.xlu0 %213
    %vm216 = vcmask 130048
    %v218 = vsel %vm216, %v208, 0
    %220 = vmatprep.subr.bf16.mxu0 0
    %221 = vmatpush1.bf16.msra.mxu0 %v209
    %222 = vmatprep.subr.bf16.mxu0 0
    %223 = vmatpush1.bf16.msra.mxu0 0
    %224 = vmatprep.subr.bf16.mxu0 0
    %225 = vmatpush1.bf16.msra.mxu0 0
    %226 = vmatprep.subr.bf16.mxu0 0
    %227 = vmatpush1.bf16.msra.mxu0 0
    %228 = vmatprep.subr.bf16.mxu0 0
    %229 = vmatpush1.bf16.msra.mxu0 0
    %230 = vmatprep.subr.bf16.mxu0 0
    %231 = vmatpush1.bf16.msra.mxu0 0
    %232 = vmatprep.subr.bf16.mxu0 0
    %233 = vmatpush1.bf16.msra.mxu0 0
    %234 = vmatprep.subr.bf16.mxu0 0
    %235 = vmatpush1.bf16.msra.mxu0 0
    %236 = vmatprep.subr.bf16.mxu0 0
    %237 = vmatpush1.bf16.msra.mxu0 0
    %238 = vmatprep.subr.bf16.mxu0 0
    %239 = vmatpush1.bf16.msra.mxu0 0
    %240 = vmatprep.subr.bf16.mxu0 0
    %241 = vmatpush1.bf16.msra.mxu0 0
    %242 = vmatprep.subr.bf16.mxu0 0
    %243 = vmatpush1.bf16.msra.mxu0 0
    %244 = vmatprep.subr.bf16.mxu0 0
    %245 = vmatpush1.bf16.msra.mxu0 0
    %246 = vmatprep.subr.bf16.mxu0 0
    %247 = vmatpush1.bf16.msra.mxu0 0
    %248 = vmatprep.subr.bf16.mxu0 0
    %249 = vmatpush1.bf16.msra.mxu0 0
    %250 = vmatprep.subr.bf16.mxu0 0
    %251 = vmatpush1.bf16.msra.mxu0 0
    %252 = vmatprep.mubr.bf16.mxu0 0
    %253 = vmatmul.mubr.bf16.gmra.mrb[0].mxu0 %v218
    %v254 = vpop.f32.mrb[0].mxu0
    %v255 = vadd.f32 %v214, %v254
    %v256 = vpop.f32.mrb[0].mxu0
    %v257 = vpop.f32.mrb[0].mxu0
    %v258 = vpop.f32.mrb[0].mxu0
    %259 = vdwg.mxu0
    %v260 = vtanh.pop %v255
    %v261 = vld [vmem:[%s7] sm:$0x3]
    %v262 = vpack.c.bf16 %v260, %v260
    %v263 = vld [vmem:[%s8] sm:$0xf]
    %265 = vset.pattern.permute.xlu0 0
    %266 = vperm.xlu0 %265, %v263
    %v267 = vpop.permute.xlu0 %266
    %vm269 = vcmask 64512
    %v271 = vsel %vm269, %v261, 0
    %vm273 = vcmask 1043456
    %v275 = vsel %vm273, %v262, 0
    %277 = vmatprep.subr.bf16.mxu0 0
    %278 = vmatpush1.bf16.msra.mxu0 %v275
    %279 = vmatprep.subr.bf16.mxu0 0
    %280 = vmatpush1.bf16.msra.mxu0 0
    %281 = vmatprep.subr.bf16.mxu0 0
    %282 = vmatpush1.bf16.msra.mxu0 0
    %283 = vmatprep.subr.bf16.mxu0 0
    %284 = vmatpush1.bf16.msra.mxu0 0
    %285 = vmatprep.subr.bf16.mxu0 0
    %286 = vmatpush1.bf16.msra.mxu0 0
    %287 = vmatprep.subr.bf16.mxu0 0
    %288 = vmatpush1.bf16.msra.mxu0 0
    %289 = vmatprep.subr.bf16.mxu0 0
    %290 = vmatpush1.bf16.msra.mxu0 0
    %291 = vmatprep.subr.bf16.mxu0 0
    %292 = vmatpush1.bf16.msra.mxu0 0
    %293 = vmatprep.subr.bf16.mxu0 0
    %294 = vmatpush1.bf16.msra.mxu0 0
    %295 = vmatprep.subr.bf16.mxu0 0
    %296 = vmatpush1.bf16.msra.mxu0 0
    %297 = vmatprep.subr.bf16.mxu0 0
    %298 = vmatpush1.bf16.msra.mxu0 0
    %299 = vmatprep.subr.bf16.mxu0 0
    %300 = vmatpush1.bf16.msra.mxu0 0
    %301 = vmatprep.subr.bf16.mxu0 0
    %302 = vmatpush1.bf16.msra.mxu0 0
    %303 = vmatprep.subr.bf16.mxu0 0
    %304 = vmatpush1.bf16.msra.mxu0 0
    %305 = vmatprep.subr.bf16.mxu0 0
    %306 = vmatpush1.bf16.msra.mxu0 0
    %307 = vmatprep.subr.bf16.mxu0 0
    %308 = vmatpush1.bf16.msra.mxu0 0
    %309 = vmatprep.mubr.bf16.mxu0 0
    %310 = vmatmul.mubr.bf16.gmra.mrb[0].mxu0 %v271
    %v311 = vpop.f32.mrb[0].mxu0
    %v312 = vadd.f32 %v267, %v311
    %v313 = vpop.f32.mrb[0].mxu0
    %v314 = vpop.f32.mrb[0].mxu0
    %v315 = vpop.f32.mrb[0].mxu0
    %316 = vdwg.mxu0
    %317 = vst [vmem:[#allocation2] sm:$0xf] %v312
    // Predicated region
    $region38: #{tpu_custom_call.1} parent=1 // pred_check
      _
    $region39: #{tpu_custom_call.1} parent=1 // pred_check_branch
      %319 = sbr.rel (0) target = $region41
    $region40: #{tpu_custom_call.1} parent=1 // pred_region
      %s321 = ssub.s32 64, 64
      %322 = vsyncadd [#allocation3], %s321
      %s324 = sshll.u32 [#allocation2], 4
      %s325 = int_to_ptr.vmem [resolvable:$true] %s324
      %327 = dma.vmem_to_hbm [thread:$0]  %s325, 64, %s9, [#allocation3]
    $region41: #{tpu_custom_call.1} parent=1 // pred_fallthru
      _
    // Predicated region
    $region42: #{tpu_custom_call.1} parent=1 // pred_check
      _
    $region43: #{tpu_custom_call.1} parent=1 // pred_check_branch
      %329 = sbr.rel (0) target = $region45
    $region44: #{tpu_custom_call.1} parent=1 // pred_region
      %330 = dma.done [#allocation3], 64
    $region45: #{tpu_custom_call.1} parent=1 // pred_fallthru
      _
    %331 = vsyncpa [#allocation3], 1

</llo_original>
